<compile_context>
chip_gen: v6e
topology: v6e:2x2x1
jax: 0.10.0
libtpu: 0.0.40
codegen_flags: <defaults>
</compile_context>

<pallas_src>
import jax
import jax.numpy as jnp
from jax.experimental import pallas as pl
from jax.experimental.pallas import tpu as pltpu


# ---------------------------------------------------------------------------
# Small helpers
# ---------------------------------------------------------------------------
def _round_up(x, m):
    return (x + m - 1) // m * m


def _sublane_multiple(dtype):
    # 8 rows for 4-byte, 16 for 2-byte, 32 for 1-byte dtypes.
    itemsize = jnp.dtype(dtype).itemsize
    return max(8, 32 // itemsize)


def _target_block_bytes():
    """~2 MiB blocks; ~4 MiB on v7x (faster HBM/TC -> amortize per-step cost)."""
    try:
        info = pltpu.get_tpu_info()
        if "7" in str(getattr(info, "chip_version", "")).lower():
            return 4 << 20
    except Exception:
        pass
    return 2 << 20


def _vmem_limit(padded_block_bytes):
    # Double-buffered input + double-buffered output + Mosaic temporaries.
    need = 4 * padded_block_bytes + (4 << 20)
    return int(min(max(need, 16 << 20), 48 << 20))


# ---------------------------------------------------------------------------
# Kernels
# ---------------------------------------------------------------------------
def _softmax_dim1_kernel(x_ref, o_ref):
    # x_ref: (tile_n, C, tile_hw).  Softmax over the C (sublane) axis; every
    # (n, spatial) column is independent, so padded lanes/rows are harmless.
    x = x_ref[...].astype(jnp.float32)
    m = jnp.max(x, axis=1, keepdims=True)
    e = jnp.exp(x - m)
    s = jnp.sum(e, axis=1, keepdims=True)
    o_ref[...] = (e / s).astype(o_ref.dtype)   # exact divide (memory-bound)


def _softmax_last_kernel(x_ref, o_ref):
    # x_ref: (tile_r, C).  Softmax over the last (lane) axis -- 2-D input path.
    x = x_ref[...].astype(jnp.float32)
    m = jnp.max(x, axis=-1, keepdims=True)
    e = jnp.exp(x - m)
    s = jnp.sum(e, axis=-1, keepdims=True)
    o_ref[...] = (e / s).astype(o_ref.dtype)


# ---------------------------------------------------------------------------
# Wrappers
# ---------------------------------------------------------------------------
def _softmax_channels_3d(x3, target_bytes=None):
    """Softmax over axis=1 of a (N, C, HW) array."""
    n, c, hw = x3.shape
    dtype = x3.dtype
    itemsize = jnp.dtype(dtype).itemsize
    sub = _sublane_multiple(dtype)
    if target_bytes is None:
        target_bytes = _target_block_bytes()

    # Padded VMEM bytes per lane-column of one batch slice (C rounded to the
    # sublane pack -- this is what actually occupies VMEM).
    padded_c_bytes = _round_up(c, sub) * itemsize
    # Largest 128-multiple lane tile whose padded (1, C, tile_hw) block fits.
    max_lanes = max(128, (target_bytes // padded_c_bytes) // 128 * 128)

    if hw > max_lanes:
        # HW must be tiled.  Flatten (n, hw_tiles) into a single parallel grid
        # axis so both v7x TensorCores get an even share even when n is 1/odd.
        tile_hw = max_lanes                         # multiple of 128
        num_hw = pl.cdiv(hw, tile_hw)               # ragged last tile is OK
        grid = (n * num_hw,)
        block = (1, c, tile_hw)
        index_map = lambda g: (g // num_hw, 0, g % num_hw)
        padded_block_bytes = padded_c_bytes * tile_hw
    else:
        # Whole HW axis fits in one block -> block the batch axis instead so
        # small-HW / large-N shapes don't pay ~0.35 us per tiny grid step.
        per_n_bytes = padded_c_bytes * _round_up(hw, 128)
        tile_n = max(1, min(n, target_bytes // per_n_bytes))
        grid = (pl.cdiv(n, tile_n),)
        block = (tile_n, c, hw)                     # last two dims = full dims
        index_map = lambda i: (i, 0, 0)
        padded_block_bytes = tile_n * per_n_bytes

    return pl.pallas_call(
        _softmax_dim1_kernel,
        out_shape=jax.ShapeDtypeStruct((n, c, hw), dtype),
        grid_spec=pltpu.PrefetchScalarGridSpec(
            num_scalar_prefetch=0,
            grid=grid,
            in_specs=[pl.BlockSpec(block, index_map)],
            out_specs=pl.BlockSpec(block, index_map),
        ),
        compiler_params=pltpu.CompilerParams(
            dimension_semantics=("parallel",),
            vmem_limit_bytes=_vmem_limit(padded_block_bytes)),
    )(x3)


def _softmax_rows_2d(x2, target_bytes=None):
    """Softmax over the last axis of a (rows, C) array (2-D input: dim=1)."""
    rows, cols = x2.shape
    dtype = x2.dtype
    itemsize = jnp.dtype(dtype).itemsize
    sub = _sublane_multiple(dtype)
    if target_bytes is None:
        target_bytes = _target_block_bytes()

    # Padded bytes per row: lane axis rounds up to 128 in VMEM.
    padded_row_bytes = _round_up(cols, 128) * itemsize
    max_rows = max(sub, (target_bytes // padded_row_bytes) // sub * sub)
    tile_r = rows if rows <= max_rows else max_rows   # full dim always legal
    grid = (pl.cdiv(rows, tile_r),)
    padded_block_bytes = _round_up(tile_r, sub) * padded_row_bytes

    return pl.pallas_call(
        _softmax_last_kernel,
        out_shape=jax.ShapeDtypeStruct((rows, cols), dtype),
        grid_spec=pltpu.PrefetchScalarGridSpec(
            num_scalar_prefetch=0,
            grid=grid,
            in_specs=[pl.BlockSpec((tile_r, cols), lambda i: (i, 0))],
            out_specs=pl.BlockSpec((tile_r, cols), lambda i: (i, 0)),
        ),
        compiler_params=pltpu.CompilerParams(
            dimension_semantics=("parallel",),
            vmem_limit_bytes=_vmem_limit(padded_block_bytes)),
    )(x2)


def prediction_forward(x):
    """Equivalent of Prediction.forward: softmax over dim=1 of x (rank >= 2)."""
    if x.ndim < 2:
        raise ValueError("Prediction.forward expects rank >= 2 input")
    if x.ndim == 2:
        return _softmax_rows_2d(x)
    n, c = x.shape[0], x.shape[1]
    x3 = x.reshape(n, c, -1)          # contiguous reshape: no HBM traffic
    return _softmax_channels_3d(x3).reshape(x.shape)


# ---------------------------------------------------------------------------
# Self-test
# ---------------------------------------------------------------------------
if __name__ == "__main__":
    # NCHW input: batch=2, channels=4, spatial=16x16 (softmax over dim=1).
    x = jax.random.normal(jax.random.PRNGKey(0), (2, 4, 16, 16), dtype=jnp.float32)
    out = jax.block_until_ready(prediction_forward(x))
    ref = jax.nn.softmax(x, axis=1)
    assert out.shape == x.shape
    assert jnp.allclose(out, ref, atol=1e-5, rtol=1e-5)
    assert jnp.allclose(jnp.sum(out, axis=1), jnp.ones((2, 16, 16)), atol=1e-5)

    # 2-D path: softmax over dim=1 (last axis).
    x2 = jax.random.normal(jax.random.PRNGKey(1), (8, 32), dtype=jnp.float32)
    out2 = jax.block_until_ready(prediction_forward(x2))
    assert jnp.allclose(out2, jax.nn.softmax(x2, axis=1), atol=1e-5, rtol=1e-5)

    # Exercise the flattened-grid HW-tiled path (ragged last HW tile) by
    # forcing a tiny block-byte target on a small shape.
    x3 = jax.random.normal(jax.random.PRNGKey(2), (3, 4, 400), dtype=jnp.float32)
    out3 = jax.block_until_ready(_softmax_channels_3d(x3, target_bytes=8192))
    assert jnp.allclose(out3, jax.nn.softmax(x3, axis=1), atol=1e-5, rtol=1e-5)

    # Exercise the batch-blocked path with a ragged last batch tile.
    out4 = jax.block_until_ready(_softmax_channels_3d(x3, target_bytes=33000))
    assert jnp.allclose(out4, jax.nn.softmax(x3, axis=1), atol=1e-5, rtol=1e-5)

    print("KERNEL_OK")
</pallas_src>

<mosaic_0001>
module attributes {stable_mosaic.version = 11 : i64} {
  func.func @_softmax_dim1_kernel(%arg0: i32, %arg1: memref<2x4x256xf32, #tpu.memory_space<vmem>>, %arg2: memref<2x4x256xf32, #tpu.memory_space<vmem>>) attributes {dimension_semantics = [#tpu.dimension_semantics<parallel>], iteration_bounds = array<i64: 1>, scalar_prefetch = 0 : i64, scratch_operands = 0 : i64, tpu.core_type = #tpu.core_type<tc>, window_params = [{transform_indices = @transform_0, window_bounds = array<i64: 2, 4, 256>}, {transform_indices = @transform_1, window_bounds = array<i64: 2, 4, 256>}]} {
    %c0 = arith.constant 0 : index
    %c0_0 = arith.constant 0 : index
    %c0_1 = arith.constant 0 : index
    %0 = vector.load %arg1[%c0, %c0_0, %c0_1] : memref<2x4x256xf32, #tpu.memory_space<vmem>>, vector<2x4x256xf32>
    %cst = arith.constant dense<0xFF800000> : vector<2x256xf32>
    %1 = vector.multi_reduction <maximumf>, %0, %cst [1] : vector<2x4x256xf32> to vector<2x256xf32>
    %2 = vector.shape_cast %1 : vector<2x256xf32> to vector<2x1x256xf32>
    %3 = vector.broadcast %2 : vector<2x1x256xf32> to vector<2x4x256xf32>
    %4 = arith.subf %0, %3 : vector<2x4x256xf32>
    %5 = math.exp %4 : vector<2x4x256xf32>
    %cst_2 = arith.constant dense<0.000000e+00> : vector<2x256xf32>
    %6 = vector.multi_reduction <add>, %5, %cst_2 [1] : vector<2x4x256xf32> to vector<2x256xf32>
    %7 = vector.shape_cast %6 : vector<2x256xf32> to vector<2x1x256xf32>
    %8 = vector.broadcast %7 : vector<2x1x256xf32> to vector<2x4x256xf32>
    %9 = arith.divf %5, %8 : vector<2x4x256xf32>
    %c0_3 = arith.constant 0 : index
    %c0_4 = arith.constant 0 : index
    %c0_5 = arith.constant 0 : index
    %10 = vector.load %arg2[%c0_3, %c0_4, %c0_5] : memref<2x4x256xf32, #tpu.memory_space<vmem>>, vector<2x4x256xf32>
    tpu.vector_store %arg2[%c0_3, %c0_4, %c0_5], %9 {strides = array<i32>} : memref<2x4x256xf32, #tpu.memory_space<vmem>>, vector<2x4x256xf32>,
    return
  }
  func.func @transform_0(%arg0: i32) -> (i32, i32, i32) {
    %c0_i32 = arith.constant 0 : i32
    %c0_i32_0 = arith.constant 0 : i32
    %c0_i32_1 = arith.constant 0 : i32
    return %arg0, %c0_i32, %c0_i32_0 : i32, i32, i32
  }
  func.func @transform_1(%arg0: i32) -> (i32, i32, i32) {
    %c0_i32 = arith.constant 0 : i32
    %c0_i32_0 = arith.constant 0 : i32
    %c0_i32_1 = arith.constant 0 : i32
    return %arg0, %c0_i32, %c0_i32_0 : i32, i32, i32
  }
}

</mosaic_0001>

<llo_original>
// kernel: tpu_custom_call.1
$region0: #{tpu_custom_call.1}
  #allocation0 [shape = 'u32[]', space=smem, size = 0x4, offset = 0x4, fixed_abs, tag = 'smem constant byte address 0x4 - core index']
  #allocation1 [shape = 'u32[144,128]{1,0:T(1,128)}', space=vmem, size = 0x12000, scoped, tag = 'internal scratch']
  %s0 = inlined_call_operand.hbm [shape: f32[2,4,256], index: 0, kind: input, shape index: {}]
  %s1 = inlined_call_operand.hbm [shape: f32[2,4,256], index: 1, kind: output, shape index: {}]
  %s2 = sld [smem:[#allocation0]]
  $region18: #{tpu_custom_call.1} parent=0
    _
  %s4 = ssub.s32 1, %s2
  %s5 = scalar_select 0, %s4, %s2
  $region1: #{tpu_custom_call.1} parent=0
    #allocation2 [shape = 'u8[8192]{0}', space=vmem, size = 0x2000, scoped, tag = 'input window, operand 0, single buffered']
    #allocation3 [shape = 's32[1]{0}', space=sflag, size = 0x4, scoped, tag = 'scoped memory for tpu_custom_call.1']
    #allocation4 [shape = 's32[1]{0}', space=sflag, size = 0x4, scoped, tag = 'scoped memory for tpu_custom_call.1']
    #allocation5 [shape = 'u8[8192]{0}', space=vmem, size = 0x2000, scoped, tag = 'output window, operand 0, single buffered']
    %6 = vsyncpa [#allocation3], 0
    %7 = vsyncpa [#allocation4], 0
    // Predicated region
    $region2: #{tpu_custom_call.1} parent=1 // pred_check
      _
    $region3: #{tpu_custom_call.1} parent=1 // pred_check_branch
      %9 = sbr.rel (0) target = $region5
    $region4: #{tpu_custom_call.1} parent=1 // pred_region
      %s11 = ssub.s32 256, 256
      %12 = vsyncadd [#allocation3], %s11
      %s13 = sshll.u32 [#allocation2], 4
      %s14 = int_to_ptr.vmem [resolvable:$true] %s13
      %19 = dma.hbm_to_vmem [thread:$0]  %s0, 256, %s14, [#allocation3], 128, 128, 8
    $region5: #{tpu_custom_call.1} parent=1 // pred_fallthru
      _
    // Predicated region
    $region6: #{tpu_custom_call.1} parent=1 // pred_check
      _
    $region7: #{tpu_custom_call.1} parent=1 // pred_check_branch
      %21 = sbr.rel (0) target = $region9
    $region8: #{tpu_custom_call.1} parent=1 // pred_region
      %22 = dma.done [#allocation3], 256
    $region9: #{tpu_custom_call.1} parent=1 // pred_fallthru
      _
    %v23 = vld [vmem:[#allocation2] sm:$0xff]
    %v24 = vld [vmem:[#allocation2 + $0x8] sm:$0xff]
    %v27 = vcombine.high %v23, %v23
    %v28 = vcombine.high %v24, %v24
    %vm31 = vcmask 1043456
    %v32 = vsel %vm31, %v23, -inf
    %v33 = vrot.slane %v32, 4
    %v34 = vmax.f32 %v32, %v33
    %v35 = vrot.slane %v34, 2
    %v36 = vmax.f32 %v34, %v35
    %v37 = vrot.slane %v36, 1
    %v38 = vmax.f32 %v36, %v37
    %v39 = vsel %vm31, %v27, -inf
    %v40 = vrot.slane %v39, 4
    %v41 = vmax.f32 %v39, %v40
    %v42 = vrot.slane %v41, 2
    %v43 = vmax.f32 %v41, %v42
    %v44 = vrot.slane %v43, 1
    %v45 = vmax.f32 %v43, %v44
    %v46 = vsel %vm31, %v24, -inf
    %v47 = vrot.slane %v46, 4
    %v48 = vmax.f32 %v46, %v47
    %v49 = vrot.slane %v48, 2
    %v50 = vmax.f32 %v48, %v49
    %v51 = vrot.slane %v50, 1
    %v52 = vmax.f32 %v50, %v51
    %v53 = vsel %vm31, %v28, -inf
    %v54 = vrot.slane %v53, 4
    %v55 = vmax.f32 %v53, %v54
    %v56 = vrot.slane %v55, 2
    %v57 = vmax.f32 %v55, %v56
    %v58 = vrot.slane %v57, 1
    %v59 = vmax.f32 %v57, %v58
    %v64 = vcombine.low %v38, %v45
    %v65 = vcombine.low %v52, %v59
    %v68 = vsub.f32 %v23, %v64
    %v69 = vsub.f32 %v24, %v65
    %v70 = vmul.f32 %v68, 1.442695
    %v71 = vpow.pop %v70
    %v72 = vmul.f32 %v69, 1.442695
    %v73 = vpow.pop %v72
    %v76 = vcombine.high %v71, %v71
    %v77 = vcombine.high %v73, %v73
    %v80 = vsel %vm31, %v71, 0.0
    %v81 = vrot.slane %v80, 4
    %v82 = vadd.f32 %v80, %v81
    %v83 = vrot.slane %v82, 2
    %v84 = vadd.f32 %v82, %v83
    %v85 = vrot.slane %v84, 1
    %v86 = vadd.f32 %v84, %v85
    %v87 = vsel %vm31, %v76, 0.0
    %v88 = vrot.slane %v87, 4
    %v89 = vadd.f32 %v87, %v88
    %v90 = vrot.slane %v89, 2
    %v91 = vadd.f32 %v89, %v90
    %v92 = vrot.slane %v91, 1
    %v93 = vadd.f32 %v91, %v92
    %v94 = vsel %vm31, %v73, 0.0
    %v95 = vrot.slane %v94, 4
    %v96 = vadd.f32 %v94, %v95
    %v97 = vrot.slane %v96, 2
    %v98 = vadd.f32 %v96, %v97
    %v99 = vrot.slane %v98, 1
    %v100 = vadd.f32 %v98, %v99
    %v101 = vsel %vm31, %v77, 0.0
    %v102 = vrot.slane %v101, 4
    %v103 = vadd.f32 %v101, %v102
    %v104 = vrot.slane %v103, 2
    %v105 = vadd.f32 %v103, %v104
    %v106 = vrot.slane %v105, 1
    %v107 = vadd.f32 %v105, %v106
    %v112 = vcombine.low %v86, %v93
    %v113 = vcombine.low %v100, %v107
    %v116 = vrcp.pop %v112
    %v117 = vmul.f32 %v71, %v116
    %v118 = vrcp.pop %v113
    %v119 = vmul.f32 %v73, %v118
    %120 = vst [vmem:[#allocation5] sm:$0xff] %v117
    %121 = vst [vmem:[#allocation5 + $0x8] sm:$0xff] %v119
    // Predicated region
    $region10: #{tpu_custom_call.1} parent=1 // pred_check
      _
    $region11: #{tpu_custom_call.1} parent=1 // pred_check_branch
      %123 = sbr.rel (0) target = $region13
    $region12: #{tpu_custom_call.1} parent=1 // pred_region
      %s125 = ssub.s32 256, 256
      %126 = vsyncadd [#allocation4], %s125
      %s127 = sshll.u32 [#allocation5], 4
      %s128 = int_to_ptr.vmem [resolvable:$true] %s127
      %133 = dma.vmem_to_hbm [thread:$0]  %s128, 256, %s1, [#allocation4], 128, 128, 8
    $region13: #{tpu_custom_call.1} parent=1 // pred_fallthru
      _
    // Predicated region
    $region14: #{tpu_custom_call.1} parent=1 // pred_check
      _
    $region15: #{tpu_custom_call.1} parent=1 // pred_check_branch
      %135 = sbr.rel (0) target = $region17
    $region16: #{tpu_custom_call.1} parent=1 // pred_region
      %136 = dma.done [#allocation4], 256
    $region17: #{tpu_custom_call.1} parent=1 // pred_fallthru
      _
    %137 = vsyncpa [#allocation3], 1
    %138 = vsyncpa [#allocation4], 1

</llo_original>
